<compile_context>
chip_gen: v7x
topology: tpu7x:2x2x1
jax: 0.10.0
libtpu: 0.0.40
codegen_flags: <defaults>
</compile_context>

<pallas_src>
import functools

import jax
import jax.numpy as jnp
from jax import lax
from jax.experimental import pallas as pl
from jax.experimental.pallas import tpu as pltpu


def _orthoreg_kernel(i_ids_ref, j_ids_ref, w_row_ref, w_col_ref, part_ref,
                     *scratch, tb, single_k):
    """Per-pair block of G = W W^T; emits lane-dense partial sums of g*g."""

    def epilogue(g):
        sq = g * g
        if tb % 128 == 0:
            # Sublane-group reduction (layout-preserving reshape, vreg adds),
            # then lane-group reduction via static aligned slices.
            p8 = sq.reshape(tb // 8, 8, tb).sum(axis=0)          # (8, tb)
            out8 = p8[:, 0:128]
            for l in range(1, tb // 128):
                out8 = out8 + p8[:, l * 128:(l + 1) * 128]       # (8, 128)
        else:
            # Small ragged blocks: scalar reduce, deposit at [0, 0].
            s = jnp.sum(sq)
            r = lax.broadcasted_iota(jnp.int32, (8, 128), 0)
            c = lax.broadcasted_iota(jnp.int32, (8, 128), 1)
            out8 = jnp.where((r == 0) & (c == 0), s, jnp.float32(0.0))
        part_ref[...] = out8.reshape(1, 8, 128)

    if single_k:
        # K fits in one tile: no accumulator scratch, single MXU pass.
        g = lax.dot_general(
            w_row_ref[...], w_col_ref[...],
            dimension_numbers=(((1,), (1,)), ((), ())),
            preferred_element_type=jnp.float32)
        epilogue(g)
    else:
        acc_ref = scratch[0]
        k = pl.program_id(1)
        nk = pl.num_programs(1)

        @pl.when(k == 0)
        def _():
            acc_ref[...] = jnp.zeros_like(acc_ref)

        acc_ref[...] += lax.dot_general(
            w_row_ref[...], w_col_ref[...],
            dimension_numbers=(((1,), (1,)), ((), ())),
            preferred_element_type=jnp.float32)

        @pl.when(k == nk - 1)
        def _():
            epilogue(acc_ref[...])


def _round_up(x, m):
    return (x + m - 1) // m * m


def _choose_tiles(M, K, itemsize, tb_req, tk_req, sub_mult, usable):
    """Pick (tb, tk) under the per-generation VMEM budget. Prefers nk == 1."""
    tb = min(_round_up(tb_req, sub_mult), _round_up(M, sub_mult))
    full_k = _round_up(K, 128)

    def budget(tb_, tk_):
        nk1 = tk_ >= full_k
        inp = 2 * 2 * tb_ * tk_ * itemsize          # 2 operands x double buffer
        acc = 0 if nk1 else tb_ * tb_ * 4           # f32 accumulator scratch
        tmp = 2 * tb_ * tb_ * 4                     # epilogue temporaries
        return inp + acc + tmp + (1 << 20)

    if tk_req is None:
        # Prefer covering all of K: drops the accumulator and the K-loop and
        # lets the resident i-block be reused across the whole j-sweep.
        if budget(tb, full_k) <= usable:
            return tb, full_k
        tk = _round_up(min(512, full_k), 128)
    else:
        tk = min(_round_up(tk_req, 128), full_k)

    # Shrink tk first, then tb, until the tile set fits the VMEM cap (v7x has
    # only 64 MiB physical per core vs 128 MiB on v5e/v6e).
    while budget(tb, tk) > usable and tk > 128:
        tk = max(128, _round_up(tk // 2, 128))
    while budget(tb, tk) > usable and tb > sub_mult:
        tb = max(sub_mult, _round_up(tb // 2, sub_mult))
    return tb, tk


def ortho_reg(W, alpha=0.1, *, tb=512, tk=None, operand_dtype=None,
              vmem_cap_bytes=None):
    """alpha * ||W @ W^T - I||_F computed with a Pallas TPU kernel."""
    M, K = W.shape

    # Operand dtype: None keeps the module's (f32) numerics; jnp.bfloat16 is
    # the recommended fast path on v5e/v6e/v7x (f32 accumulation is kept).
    if operand_dtype is None:
        operand_dtype = W.dtype if W.dtype in (jnp.bfloat16, jnp.float32) \
            else jnp.float32
    Wop = W.astype(operand_dtype)
    itemsize = jnp.dtype(operand_dtype).itemsize

    # trace(G) = ||W||_F^2, from the *operand* values so the diagonal
    # cancellation in ||G||^2 - 2 trace(G) + M is numerically consistent.
    trace_g = jnp.sum(Wop.astype(jnp.float32) ** 2)

    # Per-generation VMEM cap (v7x: 64 MiB; v5e/v6e: 128 MiB), conservative
    # fallback if the query is unavailable.
    if vmem_cap_bytes is None:
        try:
            vmem_cap_bytes = int(pltpu.get_tpu_info().vmem_capacity_bytes)
        except Exception:
            vmem_cap_bytes = 64 * 1024 * 1024
    usable = int(vmem_cap_bytes * 0.85)

    # Sub-32-bit dtypes pack along sublanes: round tb per dtype (8 f32,
    # 16 bf16, 32 for 8-bit).
    sub_mult = 8 * max(1, 4 // itemsize)
    tb_eff, tk_eff = _choose_tiles(M, K, itemsize, tb, tk, sub_mult, usable)

    m_pad = _round_up(M, tb_eff)
    k_pad = _round_up(K, tk_eff)
    if (m_pad, k_pad) != (M, K):
        Wop = jnp.pad(Wop, ((0, m_pad - M), (0, k_pad - K)))

    nb = m_pad // tb_eff
    nk = k_pad // tk_eff
    single_k = (nk == 1)

    # Upper-triangular block pairs, row-major so consecutive pairs share the
    # same i-block (its DMA is skipped by the pipeline).  Note: the pair list
    # is O(nb^2) at trace time — fine for MO-coefficient sizes.
    pairs = [(i, j) for i in range(nb) for j in range(i, nb)]
    n_pairs = len(pairs)
    i_ids = jnp.asarray([p[0] for p in pairs], dtype=jnp.int32)
    j_ids = jnp.asarray([p[1] for p in pairs], dtype=jnp.int32)
    # Off-diagonal blocks of the symmetric G are visited once, counted twice.
    pair_w = jnp.asarray([1.0 if i == j else 2.0 for (i, j) in pairs],
                         dtype=jnp.float32)

    kernel = functools.partial(_orthoreg_kernel, tb=tb_eff, single_k=single_k)
    scratch_shapes = [] if single_k else [pltpu.VMEM((tb_eff, tb_eff),
                                                     jnp.float32)]

    est = (2 * 2 * tb_eff * tk_eff * itemsize
           + (0 if single_k else tb_eff * tb_eff * 4)
           + 2 * tb_eff * tb_eff * 4
           + 2 * 8 * 128 * 4)
    vmem_limit = max(32 * 1024 * 1024,
                     min(int(vmem_cap_bytes * 0.9),
                         int(1.5 * est) + (2 << 20)))

    parts = pl.pallas_call(
        kernel,
        out_shape=jax.ShapeDtypeStruct((n_pairs, 8, 128), jnp.float32),
        grid_spec=pltpu.PrefetchScalarGridSpec(
            num_scalar_prefetch=2,
            grid=(n_pairs, nk),
            in_specs=[
                # rows of W for the i-block (constant across the j-sweep)
                pl.BlockSpec((tb_eff, tk_eff),
                             lambda p, k, i_ids, j_ids: (i_ids[p], k)),
                # rows of W for the j-block (columns of W^T)
                pl.BlockSpec((tb_eff, tk_eff),
                             lambda p, k, i_ids, j_ids: (j_ids[p], k)),
            ],
            out_specs=pl.BlockSpec((1, 8, 128),
                                   lambda p, k, i_ids, j_ids: (p, 0, 0)),
            scratch_shapes=scratch_shapes,
        ),
        compiler_params=pltpu.CompilerParams(
            # Pair axis is independent (per-pair output block) -> parallel
            # (dual TensorCore on v7x); K axis is the reduction.
            dimension_semantics=("parallel", "arbitrary"),
            vmem_limit_bytes=vmem_limit,
        ),
    )(i_ids, j_ids, Wop, Wop)

    # ||G - I||_F^2 = ||G||_F^2 - 2 trace(G) + M   (trace(G) = ||W||_F^2).
    frob_g_sq = jnp.dot(jnp.sum(parts, axis=(1, 2)), pair_w)
    loss_sq = jnp.maximum(frob_g_sq - 2.0 * trace_g + jnp.float32(M), 0.0)
    return jnp.float32(alpha) * jnp.sqrt(loss_sq)


if __name__ == "__main__":
    alpha = 0.1
    key = jax.random.PRNGKey(0)

    def ref_loss(W):
        g = jnp.dot(W, W.T, precision=lax.Precision.HIGHEST)
        eye = jnp.eye(W.shape[0], dtype=jnp.float32)
        return alpha * jnp.sqrt(jnp.sum((g - eye) ** 2))

    # Case 1: small MO-coefficient matrix, defaults -> single block, nk=1.
    k1, k2, k3, k4 = jax.random.split(key, 4)
    W1 = jax.random.normal(k1, (32, 256), dtype=jnp.float32)
    loss1 = jax.block_until_ready(jax.jit(lambda w: ortho_reg(w, alpha))(W1))
    assert jnp.allclose(loss1, ref_loss(W1), rtol=1e-4, atol=1e-4), \
        (loss1, ref_loss(W1))

    # Case 2: ragged shape + tiny tiles -> multi-pair grid, K reduction,
    # zero-padding, small-block epilogue path.
    W2 = jax.random.normal(k2, (40, 200), dtype=jnp.float32)
    loss2 = jax.block_until_ready(
        jax.jit(lambda w: ortho_reg(w, alpha, tb=16, tk=128))(W2))
    assert jnp.allclose(loss2, ref_loss(W2), rtol=1e-4, atol=1e-4), \
        (loss2, ref_loss(W2))

    # Case 3: bf16 operand fast path, multi-pair, lane-dense epilogue (tb=128).
    W3 = jax.random.normal(k3, (256, 384), dtype=jnp.float32)
    loss3 = jax.block_until_ready(
        jax.jit(lambda w: ortho_reg(w, alpha, tb=128,
                                    operand_dtype=jnp.bfloat16))(W3))
    assert jnp.allclose(loss3, ref_loss(W3), rtol=2e-2, atol=1e-2), \
        (loss3, ref_loss(W3))

    # Case 4: f32, K tiled (nk=2) with the VMEM accumulator + lane-dense
    # epilogue at tb=256.
    W4 = jax.random.normal(k4, (256, 512), dtype=jnp.float32)
    loss4 = jax.block_until_ready(
        jax.jit(lambda w: ortho_reg(w, alpha, tb=256, tk=256))(W4))
    assert jnp.allclose(loss4, ref_loss(W4), rtol=1e-4, atol=1e-4), \
        (loss4, ref_loss(W4))

    print("KERNEL_OK")
</pallas_src>

<mosaic_0001>
module attributes {stable_mosaic.version = 11 : i64} {
  func.func @_orthoreg_kernel(%arg0: i32, %arg1: i32, %arg2: memref<1xi32, #tpu.memory_space<smem>>, %arg3: memref<1xi32, #tpu.memory_space<smem>>, %arg4: memref<32x256xf32, #tpu.memory_space<vmem>>, %arg5: memref<32x256xf32, #tpu.memory_space<vmem>>, %arg6: memref<1x8x128xf32, #tpu.memory_space<vmem>>) attributes {dimension_semantics = [#tpu.dimension_semantics<parallel>, #tpu.dimension_semantics<arbitrary>], iteration_bounds = array<i64: 1, 1>, scalar_prefetch = 2 : i64, scratch_operands = 0 : i64, tpu.core_type = #tpu.core_type<tc>, window_params = [{transform_indices = @transform_0, window_bounds = array<i64: 32, 256>}, {transform_indices = @transform_1, window_bounds = array<i64: 32, 256>}, {transform_indices = @transform_2, window_bounds = array<i64: 1, 8, 128>}]} {
    %c0 = arith.constant 0 : index
    %c0_0 = arith.constant 0 : index
    %0 = vector.load %arg4[%c0, %c0_0] : memref<32x256xf32, #tpu.memory_space<vmem>>, vector<32x256xf32>
    %c0_1 = arith.constant 0 : index
    %c0_2 = arith.constant 0 : index
    %1 = vector.load %arg5[%c0_1, %c0_2] : memref<32x256xf32, #tpu.memory_space<vmem>>, vector<32x256xf32>
    %cst = arith.constant dense<0.000000e+00> : vector<32x32xf32>
    %2 = tpu.matmul %0, %1, %cst {dimension_numbers = #tpu.dot_dimension_numbers<[1], [1], [0], [0], [0, 0, 1, 0], [], []>} : vector<32x256xf32>, vector<32x256xf32>, vector<32x32xf32> -> vector<32x32xf32>
    %3 = arith.mulf %2, %2 : vector<32x32xf32>
    %4 = vector.shape_cast %3 : vector<32x32xf32> to vector<1x32x32xf32>
    %cst_3 = arith.constant dense<0.000000e+00> : vector<1xf32>
    %5 = vector.multi_reduction <add>, %4, %cst_3 [1, 2] : vector<1x32x32xf32> to vector<1xf32>
    %6 = vector.shape_cast %5 : vector<1xf32> to vector<1x1x1xf32>
    %7 = vector.extract %6[0, 0, 0] : f32 from vector<1x1x1xf32>
    %8 = tpu.iota {dimensions = array<i32: 0>} : vector<8x128xi32>
    %9 = tpu.iota {dimensions = array<i32: 1>} : vector<8x128xi32>
    %c0_i32 = arith.constant 0 : i32
    %10 = vector.broadcast %c0_i32 : i32 to vector<8x128xi32>
    %11 = arith.cmpi eq, %8, %10 : vector<8x128xi32>
    %c0_i32_4 = arith.constant 0 : i32
    %12 = vector.broadcast %c0_i32_4 : i32 to vector<8x128xi32>
    %13 = arith.cmpi eq, %9, %12 : vector<8x128xi32>
    %14 = arith.andi %11, %13 : vector<8x128xi1>
    %cst_5 = arith.constant 0.000000e+00 : f32
    %15 = vector.broadcast %7 : f32 to vector<8x128xf32>
    %16 = vector.broadcast %cst_5 : f32 to vector<8x128xf32>
    %17 = arith.select %14, %15, %16 : vector<8x128xi1>, vector<8x128xf32>
    %18 = vector.shape_cast %17 : vector<8x128xf32> to vector<1x8x128xf32>
    %c0_6 = arith.constant 0 : index
    %c0_7 = arith.constant 0 : index
    %c0_8 = arith.constant 0 : index
    %19 = vector.load %arg6[%c0_6, %c0_7, %c0_8] : memref<1x8x128xf32, #tpu.memory_space<vmem>>, vector<1x8x128xf32>
    tpu.vector_store %arg6[%c0_6, %c0_7, %c0_8], %18 {strides = array<i32>} : memref<1x8x128xf32, #tpu.memory_space<vmem>>, vector<1x8x128xf32>,
    return
  }
  func.func @transform_0(%arg0: i32, %arg1: i32, %arg2: memref<1xi32, #tpu.memory_space<smem>>, %arg3: memref<1xi32, #tpu.memory_space<smem>>) -> (i32, i32) {
    %0 = arith.index_cast %arg0 : i32 to index
    %1 = memref.load %arg2[%0] : memref<1xi32, #tpu.memory_space<smem>>
    %c0_i32 = arith.constant 0 : i32
    return %1, %arg1 : i32, i32
  }
  func.func @transform_1(%arg0: i32, %arg1: i32, %arg2: memref<1xi32, #tpu.memory_space<smem>>, %arg3: memref<1xi32, #tpu.memory_space<smem>>) -> (i32, i32) {
    %0 = arith.index_cast %arg0 : i32 to index
    %1 = memref.load %arg3[%0] : memref<1xi32, #tpu.memory_space<smem>>
    %c0_i32 = arith.constant 0 : i32
    return %1, %arg1 : i32, i32
  }
  func.func @transform_2(%arg0: i32, %arg1: i32, %arg2: memref<1xi32, #tpu.memory_space<smem>>, %arg3: memref<1xi32, #tpu.memory_space<smem>>) -> (i32, i32, i32) {
    %c0_i32 = arith.constant 0 : i32
    %c0_i32_0 = arith.constant 0 : i32
    %c0_i32_1 = arith.constant 0 : i32
    return %arg0, %c0_i32, %c0_i32_0 : i32, i32, i32
  }
}

</mosaic_0001>

<llo_original>
// kernel: _lambda_.1
$region0: #{_lambda_.1}
  #allocation0 [shape = 'u32[]', space=smem, size = 0x4, offset = 0x4, fixed_abs, tag = 'smem constant byte address 0x4 - core index']
  #allocation1 [shape = 'u32[144,128]{1,0:T(1,128)}', space=vmem, size = 0x12000, scoped, tag = 'internal scratch']
  #allocation2 [shape = 's32[1]{0}', space=sflag, size = 0x4, scoped, tag = 'scoped memory for _lambda_.1']
  #allocation3 [shape = 's32[1]{0:T(128)S(6)}', space=smem, size = 0x200, scoped, tag = 'prefetched SMEM operand 0']
  #allocation4 [shape = 's32[1]{0:T(128)S(6)}', space=smem, size = 0x200, scoped, tag = 'prefetched SMEM operand 1']
  %s0 = inlined_call_operand.<no memory space> [shape: s32[1], index: 0, kind: input, shape index: {}, may-alias: {0,1}]
  %s1 = inlined_call_operand.<no memory space> [shape: s32[1], index: 1, kind: input, shape index: {}, may-alias: {0,1}]
  %s2 = inlined_call_operand.hbm [shape: f32[32,256], index: 2, kind: input, shape index: {}, may-alias: {2,3}]
  %s3 = inlined_call_operand.hbm [shape: f32[32,256], index: 3, kind: input, shape index: {}, may-alias: {2,3}]
  %s4 = inlined_call_operand.vmem [shape: f32[1,8,128], index: 4, kind: output, shape index: {}]
  %s5 = sld [smem:[#allocation0]]
  $region26: #{_lambda_.1} parent=0
    _
  %s7 = ssub.s32 1, %s5
  %s8 = scalar_select 0, %s7, %s5
  %9 = sst [smem:[#allocation3]] %s0
  %10 = sst [smem:[#allocation4]] %s1
  $region1: #{_lambda_.1} parent=0
    #allocation5 [shape = 'u8[32768]{0}', space=vmem, size = 0x8000, scoped, tag = 'input window, operand 2, single buffered']
    #allocation6 [shape = 's32[1]{0}', space=sflag, size = 0x4, scoped, tag = 'scoped memory for _lambda_.1']
    #allocation7 [shape = 'u8[32768]{0}', space=vmem, size = 0x8000, scoped, tag = 'input window, operand 3, single buffered']
    #allocation8 [shape = 's32[1]{0}', space=sflag, size = 0x4, scoped, tag = 'scoped memory for _lambda_.1']
    %11 = vsyncpa [#allocation6], 0
    %12 = vsyncpa [#allocation8], 0
    // Predicated region
    $region2: #{_lambda_.1} parent=1 // pred_check
      _
    $region3: #{_lambda_.1} parent=1 // pred_check_branch
      %14 = sbr.rel (0) target = $region5
    $region4: #{_lambda_.1} parent=1 // pred_region
      %s15 = sld [smem:[#allocation3]]
      %s16 = smul.u32 4, %s15
      %s18 = ssub.s32 1024, 1024
      %19 = vsyncadd [#allocation6], %s18
      %s20 = smul.addr %s16, 2
      %s21 = smul.addr %s20, 128
      %s22 = scalar_lea.hbm %s2, %s21
      %s23 = sshll.u32 [#allocation5], 4
      %s24 = int_to_ptr.vmem [resolvable:$true] %s23
      %29 = dma.hbm_to_vmem [thread:$0]  %s22, 1024, %s24, [#allocation6], 256, 256, 16
    $region5: #{_lambda_.1} parent=1 // pred_fallthru
      _
    // Predicated region
    $region6: #{_lambda_.1} parent=1 // pred_check
      _
    $region7: #{_lambda_.1} parent=1 // pred_check_branch
      %31 = sbr.rel (0) target = $region9
    $region8: #{_lambda_.1} parent=1 // pred_region
      %s32 = sld [smem:[#allocation4]]
      %s33 = smul.u32 4, %s32
      %s35 = ssub.s32 1024, 1024
      %36 = vsyncadd [#allocation8], %s35
      %s37 = smul.addr %s33, 2
      %s38 = smul.addr %s37, 128
      %s39 = scalar_lea.hbm %s3, %s38
      %s40 = sshll.u32 [#allocation7], 4
      %s41 = int_to_ptr.vmem [resolvable:$true] %s40
      %46 = dma.hbm_to_vmem [thread:$0]  %s39, 1024, %s41, [#allocation8], 256, 256, 16
    $region9: #{_lambda_.1} parent=1 // pred_fallthru
      _
    // Predicated region
    $region10: #{_lambda_.1} parent=1 // pred_check
      _
    $region11: #{_lambda_.1} parent=1 // pred_check_branch
      %48 = sbr.rel (0) target = $region13
    $region12: #{_lambda_.1} parent=1 // pred_region
      %49 = dma.done [#allocation6], 1024
    $region13: #{_lambda_.1} parent=1 // pred_fallthru
      _
    // Predicated region
    $region14: #{_lambda_.1} parent=1 // pred_check
      _
    $region15: #{_lambda_.1} parent=1 // pred_check_branch
      %51 = sbr.rel (0) target = $region17
    $region16: #{_lambda_.1} parent=1 // pred_region
      %52 = dma.done [#allocation8], 1024
    $region17: #{_lambda_.1} parent=1 // pred_fallthru
      _
    %s53 = sld [smem:[#allocation3]]
    %s54 = smul.u32 4, %s53
    %s55 = sld [smem:[#allocation4]]
    %s56 = smul.u32 4, %s55
    %v57 = vld [vmem:[#allocation5] sm:$0xff]
    %v58 = vld [vmem:[#allocation5 + $0x8] sm:$0xff]
    %v59 = vld [vmem:[#allocation5 + $0x10] sm:$0xff]
    %v60 = vld [vmem:[#allocation5 + $0x18] sm:$0xff]
    %v61 = vld [vmem:[#allocation5 + $0x20] sm:$0xff]
    %v62 = vld [vmem:[#allocation5 + $0x28] sm:$0xff]
    %v63 = vld [vmem:[#allocation5 + $0x30] sm:$0xff]
    %v64 = vld [vmem:[#allocation5 + $0x38] sm:$0xff]
    %v65 = vld [vmem:[#allocation7] sm:$0xff]
    %v66 = vld [vmem:[#allocation7 + $0x8] sm:$0xff]
    %v67 = vld [vmem:[#allocation7 + $0x10] sm:$0xff]
    %v68 = vld [vmem:[#allocation7 + $0x18] sm:$0xff]
    %v69 = vld [vmem:[#allocation7 + $0x20] sm:$0xff]
    %v70 = vld [vmem:[#allocation7 + $0x28] sm:$0xff]
    %v71 = vld [vmem:[#allocation7 + $0x30] sm:$0xff]
    %v72 = vld [vmem:[#allocation7 + $0x38] sm:$0xff]
    %73 = vmatprep.subr.mxu0 %v66
    %74 = vmatpush1.xpose.msra.mxu0 %v65
    %75 = vmatprep.subr.mxu0 %v68
    %76 = vmatpush1.xpose.msra.mxu0 %v67
    %77 = vmatprep.subr.mxu0 %v70
    %78 = vmatpush1.xpose.msra.mxu0 %v69
    %79 = vmatprep.subr.mxu0 %v72
    %80 = vmatpush1.xpose.msra.mxu0 %v71
    %81 = vmatprep.subr.mxu0 0.0
    %82 = vmatpush1.xpose.msra.mxu0 0.0
    %83 = vmatprep.subr.mxu0 0.0
    %84 = vmatpush1.xpose.msra.mxu0 0.0
    %85 = vmatprep.subr.mxu0 0.0
    %86 = vmatpush1.xpose.msra.mxu0 0.0
    %87 = vmatprep.subr.mxu0 0.0
    %88 = vmatpush1.xpose.msra.mxu0 0.0
    %89 = vmatprep.subr.mxu0 0.0
    %90 = vmatpush1.xpose.msra.mxu0 0.0
    %91 = vmatprep.subr.mxu0 0.0
    %92 = vmatpush1.xpose.msra.mxu0 0.0
    %93 = vmatprep.subr.mxu0 0.0
    %94 = vmatpush1.xpose.msra.mxu0 0.0
    %95 = vmatprep.subr.mxu0 0.0
    %96 = vmatpush1.xpose.msra.mxu0 0.0
    %97 = vmatprep.subr.mxu0 0.0
    %98 = vmatpush1.xpose.msra.mxu0 0.0
    %99 = vmatprep.subr.mxu0 0.0
    %100 = vmatpush1.xpose.msra.mxu0 0.0
    %101 = vmatprep.subr.mxu0 0.0
    %102 = vmatpush1.xpose.msra.mxu0 0.0
    %103 = vmatprep.subr.mxu0 0.0
    %104 = vmatpush1.xpose.msra.mxu0 0.0
    %105 = vmatprep.subr.mxu0 0.0
    %106 = vmatpush1.xpose.msra.mxu0 0.0
    %107 = vmatprep.subr.mxu0 0.0
    %108 = vmatpush1.xpose.msra.mxu0 0.0
    %109 = vmatprep.subr.mxu0 0.0
    %110 = vmatpush1.xpose.msra.mxu0 0.0
    %111 = vmatprep.subr.mxu0 0.0
    %112 = vmatpush1.xpose.msra.mxu0 0.0
    %113 = vmatprep.subr.mxu0 0.0
    %114 = vmatpush1.xpose.msra.mxu0 0.0
    %115 = vmatprep.subr.mxu0 0.0
    %116 = vmatpush1.xpose.msra.mxu0 0.0
    %117 = vmatprep.subr.mxu0 0.0
    %118 = vmatpush1.xpose.msra.mxu0 0.0
    %119 = vmatprep.subr.mxu0 0.0
    %120 = vmatpush1.xpose.msra.mxu0 0.0
    %121 = vmatprep.subr.mxu0 0.0
    %122 = vmatpush1.xpose.msra.mxu0 0.0
    %123 = vmatprep.subr.mxu0 0.0
    %124 = vmatpush1.xpose.msra.mxu0 0.0
    %125 = vmatprep.subr.mxu0 0.0
    %126 = vmatpush1.xpose.msra.mxu0 0.0
    %127 = vmatprep.subr.mxu0 0.0
    %128 = vmatpush1.xpose.msra.mxu0 0.0
    %129 = vmatprep.subr.mxu0 0.0
    %130 = vmatpush1.xpose.msra.mxu0 0.0
    %131 = vmatprep.subr.mxu0 0.0
    %132 = vmatpush1.xpose.msra.mxu0 0.0
    %133 = vmatprep.subr.mxu0 0.0
    %134 = vmatpush1.xpose.msra.mxu0 0.0
    %135 = vmatprep.subr.mxu0 0.0
    %136 = vmatpush1.xpose.msra.mxu0 0.0
    %137 = vmatprep.mubr.f32.mxu0 %v58
    %138 = vmatmul.mubr.f32.gmra.mrb[0].mxu0 %v57
    %v139 = vpop.f32.mrb[0].mxu0
    %v140 = vadd.f32 0.0, %v139
    %v141 = vpop.f32.mrb[0].mxu0
    %142 = vmatprep.mubr.f32.mxu0 %v60
    %143 = vmatmul.mubr.f32.gmra.mrb[0].mxu0 %v59
    %v144 = vpop.f32.mrb[0].mxu0
    %v145 = vadd.f32 0.0, %v144
    %v146 = vpop.f32.mrb[0].mxu0
    %147 = vmatprep.mubr.f32.mxu0 %v62
    %148 = vmatmul.mubr.f32.gmra.mrb[0].mxu0 %v61
    %v149 = vpop.f32.mrb[0].mxu0
    %v150 = vadd.f32 0.0, %v149
    %v151 = vpop.f32.mrb[0].mxu0
    %152 = vmatprep.mubr.f32.mxu0 %v64
    %153 = vmatmul.mubr.f32.gmra.mrb[0].mxu0 %v63
    %v154 = vpop.f32.mrb[0].mxu0
    %v155 = vadd.f32 0.0, %v154
    %v156 = vpop.f32.mrb[0].mxu0
    %157 = vdwg.mxu0
    %v158 = vmul.f32 %v140, %v140
    %v159 = vmul.f32 %v145, %v145
    %v160 = vmul.f32 %v150, %v150
    %v161 = vmul.f32 %v155, %v155
    %vm162 = vcmask 261120
    %v163 = vsel %vm162, %v158, 0.0
    %v164 = vsel %vm162, %v159, 0.0
    %v165 = vadd.f32 %v163, %v164
    %v166 = vsel %vm162, %v160, 0.0
    %v167 = vadd.f32 %v165, %v166
    %v168 = vsel %vm162, %v161, 0.0
    %v169 = vadd.f32 %v167, %v168
    %170 = vadd.xlane.f32.xlu0 %v169
    %v171 = vpop.xlane.xlu0 %170
    %v172 = vrot.slane %v171, 4
    %v173 = vadd.f32 %v171, %v172
    %v174 = vrot.slane %v173, 2
    %v175 = vadd.f32 %v173, %v174
    %v176 = vrot.slane %v175, 1
    %v177 = vadd.f32 %v175, %v176
    %s178 = vtos %v177
    %v179 = vlaneseq
    %v180 = vshrl.u32 %v179, 7
    %v181 = vlaneseq
    %v182 = vand.u32 %v181, 127
    %vm183 = vcmp.eq.s32.totalorder %v180, 0
    %vm184 = vcmp.eq.s32.totalorder %v182, 0
    %vm185 = vmand %vm183, %vm184
    %v186 = vstv %s178
    %v187 = vsel %vm185, %v186, 0.0
    %188 = vst [vmem:[%s4] sm:$0xff] %v187
    // Predicated region
    $region18: #{_lambda_.1} parent=1 // pred_check
      _
    $region19: #{_lambda_.1} parent=1 // pred_check_branch
      %190 = sbr.rel (0) target = $region21
    $region20: #{_lambda_.1} parent=1 // pred_region
      _
    $region21: #{_lambda_.1} parent=1 // pred_fallthru
      _
    // Predicated region
    $region22: #{_lambda_.1} parent=1 // pred_check
      _
    $region23: #{_lambda_.1} parent=1 // pred_check_branch
      %192 = sbr.rel (0) target = $region25
    $region24: #{_lambda_.1} parent=1 // pred_region
      _
    $region25: #{_lambda_.1} parent=1 // pred_fallthru
      _
    %193 = vsyncpa [#allocation6], 1
    %194 = vsyncpa [#allocation8], 1

</llo_original>
